<compile_context>
chip_gen: v7x
topology: tpu7x:2x2x1
jax: 0.10.0
libtpu: 0.0.40
codegen_flags: <defaults>
</compile_context>

<pallas_src>
import jax
import jax.numpy as jnp
from jax import lax
from jax.experimental import pallas as pl
from jax.experimental.pallas import tpu as pltpu

_MXU_DTYPE = jnp.bfloat16  # MXU operand dtype; accumulation is always f32.


def _make_iskip_kernel(width, hw, b_tile):
    """Kernel factory. `width` = W (static lane shift per conv tap), `hw` = H*W."""
    lanes = b_tile * hw

    def kernel(mask_ref, x_ref, w_ref, b_ref, out_ref):
        # mask_ref : (9, 1, lanes) f32 border-validity masks (1 in-bounds, 0 out)
        # x_ref    : (b_tile, C, hw)  batch tile, channels x flattened spatial
        # w_ref    : (C, 9*C) bf16    conv weights, column order (dy*3+dx)*C + ci
        # b_ref    : (C, 1)   f32     conv bias
        # out_ref  : (b_tile, C, hw)
        C = x_ref.shape[1]

        # Images side-by-side on the lane axis -> (C, lanes), exact f32.
        if b_tile == 1:
            x_f32 = x_ref[0].astype(jnp.float32)
        else:
            x_f32 = jnp.concatenate(
                [x_ref[b].astype(jnp.float32) for b in range(b_tile)], axis=-1)

        # im2col: 9 lane-rolled (XLU), border-masked (f32 VPU) copies stacked on
        # the contraction axis.  Cast to bf16 once, after masking.
        taps = []
        for dy in range(3):
            for dx in range(3):
                tap = dy * 3 + dx
                # flattened source index = output index + s, s = oy*W + ox
                s = (dy - 1) * width + (dx - 1)
                if tap == 4:                       # center tap: always in-bounds
                    rolled = x_f32
                else:
                    shift = (-s) % lanes
                    rolled = pltpu.roll(x_f32, shift, 1) if shift else x_f32
                    rolled = rolled * mask_ref[tap]      # f32 mask (v5e-friendly)
                taps.append(rolled)
        patch = jnp.concatenate(taps, axis=0).astype(_MXU_DTYPE)   # (9C, lanes)
        # TODO(synk): for large C (vreg spills) stage `patch` through a
        # sublane-aligned VMEM scratch instead of keeping it live as a value.

        # Single (C, 9C) x (9C, lanes) MXU matmul with f32 accumulation.
        acc = jnp.dot(w_ref[...], patch, preferred_element_type=jnp.float32)

        out = acc + b_ref[...] + x_f32             # bias + residual in f32 (VPU)

        for b in range(b_tile):                    # lane-aligned (hw % 128 == 0) slices
            out_ref[b] = out[:, b * hw:(b + 1) * hw].astype(out_ref.dtype)

    return kernel


def _border_masks(H, W, b_tile):
    """(9, 1, b_tile*H*W) f32 masks: 1 where the 3x3 tap's source pixel is in-bounds."""
    h_idx = jnp.arange(H)
    w_idx = jnp.arange(W)
    rows = []
    for dy in range(3):
        for dx in range(3):
            vh = (h_idx + (dy - 1) >= 0) & (h_idx + (dy - 1) < H)
            vw = (w_idx + (dx - 1) >= 0) & (w_idx + (dx - 1) < W)
            rows.append((vh[:, None] & vw[None, :]).reshape(-1))
    m = jnp.stack(rows, axis=0)[:, None, :].astype(jnp.float32)   # (9, 1, HW)
    if b_tile > 1:
        m = jnp.tile(m, (1, 1, b_tile))
    return m


def _choose_batch_tile(N, HW, target_lanes=2048):
    """Widen the per-step lane extent, but keep >=2 grid steps for megacore."""
    bt = max(1, target_lanes // max(HW, 1))
    if N >= 2:
        bt = min(bt, N // 2)
    bt = max(1, min(bt, N))
    while N % bt:          # avoid partial blocks
        bt -= 1
    return bt


def iskip_forward(x_nchw, weight_oihw, bias, *, batch_tile=None):
    """ISkip forward. x_nchw: (N, C, H, W); weight_oihw: (C, C, 3, 3); bias: (C,)."""
    N, C, H, W = x_nchw.shape
    HW = H * W
    b_tile = batch_tile if batch_tile is not None else _choose_batch_tile(N, HW)
    assert N % b_tile == 0

    # Free row-major reshape: no transpose, no spatial pad, no duplicate input.
    x_flat = x_nchw.reshape(N, C, HW)
    # OIHW -> (C_out, 9*C_in), column order (dy, dx, ci); bf16 MXU operand.
    w_mat = jnp.transpose(weight_oihw, (0, 2, 3, 1)).reshape(C, 9 * C)
    w_mat = w_mat.astype(_MXU_DTYPE)
    b_col = bias.reshape(C, 1).astype(jnp.float32)
    masks = _border_masks(H, W, b_tile)

    kernel = _make_iskip_kernel(W, HW, b_tile)

    # Explicit scoped-VMEM budget (defaults are only 16 MiB v5e / 32 MiB v6e).
    itemsize = jnp.dtype(x_nchw.dtype).itemsize
    per_step = (2 * 2 * b_tile * C * HW * itemsize      # x + out, double-buffered
                + 2 * 9 * b_tile * HW * 4               # masks
                + 2 * (9 * C * C * 2 + C * 4))          # weights + bias
    vmem_limit = int(min(64 * 1024 * 1024, max(32 * 1024 * 1024, 6 * per_step)))
    # TODO(synk): for very large C*HW (v7x has only 64 MiB VMEM) add spatial
    # full-row tiling with per-tile border masks; one (b_tile, C, HW) block per
    # step is sufficient for the shapes exercised here.

    out_flat = pl.pallas_call(
        kernel,
        out_shape=jax.ShapeDtypeStruct((N, C, HW), x_nchw.dtype),
        grid_spec=pltpu.PrefetchScalarGridSpec(
            num_scalar_prefetch=0,
            grid=(N // b_tile,),
            in_specs=[
                pl.BlockSpec((9, 1, b_tile * HW), lambda n: (0, 0, 0)),  # masks
                pl.BlockSpec((b_tile, C, HW), lambda n: (n, 0, 0)),      # x tile
                pl.BlockSpec((C, 9 * C), lambda n: (0, 0)),              # weights
                pl.BlockSpec((C, 1), lambda n: (0, 0)),                  # bias
            ],
            out_specs=pl.BlockSpec((b_tile, C, HW), lambda n: (n, 0, 0)),
        ),
        compiler_params=pltpu.CompilerParams(
            dimension_semantics=("parallel",),
            vmem_limit_bytes=vmem_limit),
    )(masks, x_flat, w_mat, b_col)

    return out_flat.reshape(N, C, H, W)


def _reference(x_nchw, weight_oihw, bias):
    # Pure-JAX reference: conv3x3(pad=1) + bias + residual in NCHW.  Conv
    # operands are rounded to the kernel's MXU dtype so both paths see identical
    # inputs; both accumulate in f32.
    xq = x_nchw.astype(_MXU_DTYPE).astype(jnp.float32)
    wq = weight_oihw.astype(_MXU_DTYPE).astype(jnp.float32)
    conv = lax.conv_general_dilated(
        xq, wq, window_strides=(1, 1), padding=((1, 1), (1, 1)),
        dimension_numbers=("NCHW", "OIHW", "NCHW"),
        precision=lax.Precision.HIGHEST)
    return conv + bias.reshape(1, -1, 1, 1) + x_nchw


if __name__ == "__main__":
    key = jax.random.PRNGKey(0)
    kx, kw, kb, kx2 = jax.random.split(key, 4)

    N, C, H, W = 2, 4, 16, 16
    x = jax.random.normal(kx, (N, C, H, W), dtype=jnp.float32)
    # Deterministic synthetic conv params (Conv2d(C, C, 3, padding=1) shapes).
    fan_in = C * 3 * 3
    weight = jax.random.normal(kw, (C, C, 3, 3), dtype=jnp.float32) / jnp.sqrt(fan_in)
    bias = jax.random.normal(kb, (C,), dtype=jnp.float32) * 0.1

    # Main check: batch-parallel grid (B_TILE = 1, 2 grid steps).
    out = iskip_forward(x, weight, bias)
    out = jax.block_until_ready(out)
    ref = _reference(x, weight, bias)
    assert out.shape == (N, C, H, W)
    assert jnp.allclose(out, ref, atol=2e-3, rtol=2e-3), "mismatch vs reference"

    # Second check: exercise the multi-image-per-step (lane-concatenated) path.
    N2 = 8
    x2 = jax.random.normal(kx2, (N2, C, H, W), dtype=jnp.float32)
    out2 = jax.block_until_ready(iskip_forward(x2, weight, bias))
    ref2 = _reference(x2, weight, bias)
    assert out2.shape == (N2, C, H, W)
    assert jnp.allclose(out2, ref2, atol=2e-3, rtol=2e-3), "mismatch vs reference (batched)"

    # TODO(synk): skip_invert=True branch uses RevBlock (not provided); only the
    # skip_invert=False residual path is implemented here.
    print("KERNEL_OK")
</pallas_src>

<mosaic_0001>
module attributes {stable_mosaic.version = 11 : i64} {
  func.func @kernel(%arg0: i32, %arg1: memref<9x1x256xf32, #tpu.memory_space<vmem>>, %arg2: memref<1x4x256xf32, #tpu.memory_space<vmem>>, %arg3: memref<4x36xbf16, #tpu.memory_space<vmem>>, %arg4: memref<4x1xf32, #tpu.memory_space<vmem>>, %arg5: memref<1x4x256xf32, #tpu.memory_space<vmem>>) attributes {dimension_semantics = [#tpu.dimension_semantics<parallel>], iteration_bounds = array<i64: 2>, scalar_prefetch = 0 : i64, scratch_operands = 0 : i64, tpu.core_type = #tpu.core_type<tc>, window_params = [{pipeline_mode = #tpu.pipeline_mode<synchronous>, transform_indices = @transform_0, window_bounds = array<i64: 9, 1, 256>}, {transform_indices = @transform_1, window_bounds = array<i64: 1, 4, 256>}, {pipeline_mode = #tpu.pipeline_mode<synchronous>, transform_indices = @transform_2, window_bounds = array<i64: 4, 36>}, {pipeline_mode = #tpu.pipeline_mode<synchronous>, transform_indices = @transform_3, window_bounds = array<i64: 4, 1>}, {transform_indices = @transform_4, window_bounds = array<i64: 1, 4, 256>}]} {
    %c0 = arith.constant 0 : index
    %c0_0 = arith.constant 0 : index
    %c0_1 = arith.constant 0 : index
    %0 = vector.load %arg2[%c0, %c0_0, %c0_1] : memref<1x4x256xf32, #tpu.memory_space<vmem>>, vector<1x4x256xf32>
    %1 = vector.shape_cast %0 : vector<1x4x256xf32> to vector<4x256xf32>
    %c17_i32 = arith.constant 17 : i32
    %2 = tpu.dynamic_rotate %1 by %c17_i32 dim 1 : vector<4x256xf32>, i32 -> vector<4x256xf32>
    %c0_2 = arith.constant 0 : index
    %c0_3 = arith.constant 0 : index
    %c0_4 = arith.constant 0 : index
    %3 = vector.load %arg1[%c0_2, %c0_3, %c0_4] : memref<9x1x256xf32, #tpu.memory_space<vmem>>, vector<1x1x256xf32>
    %4 = vector.shape_cast %3 : vector<1x1x256xf32> to vector<1x256xf32>
    %5 = vector.broadcast %4 : vector<1x256xf32> to vector<4x256xf32>
    %6 = arith.mulf %2, %5 : vector<4x256xf32>
    %c16_i32 = arith.constant 16 : i32
    %7 = tpu.dynamic_rotate %1 by %c16_i32 dim 1 : vector<4x256xf32>, i32 -> vector<4x256xf32>
    %c1 = arith.constant 1 : index
    %c0_5 = arith.constant 0 : index
    %c0_6 = arith.constant 0 : index
    %8 = vector.load %arg1[%c1, %c0_5, %c0_6] : memref<9x1x256xf32, #tpu.memory_space<vmem>>, vector<1x1x256xf32>
    %9 = vector.shape_cast %8 : vector<1x1x256xf32> to vector<1x256xf32>
    %10 = vector.broadcast %9 : vector<1x256xf32> to vector<4x256xf32>
    %11 = arith.mulf %7, %10 : vector<4x256xf32>
    %c15_i32 = arith.constant 15 : i32
    %12 = tpu.dynamic_rotate %1 by %c15_i32 dim 1 : vector<4x256xf32>, i32 -> vector<4x256xf32>
    %c2 = arith.constant 2 : index
    %c0_7 = arith.constant 0 : index
    %c0_8 = arith.constant 0 : index
    %13 = vector.load %arg1[%c2, %c0_7, %c0_8] : memref<9x1x256xf32, #tpu.memory_space<vmem>>, vector<1x1x256xf32>
    %14 = vector.shape_cast %13 : vector<1x1x256xf32> to vector<1x256xf32>
    %15 = vector.broadcast %14 : vector<1x256xf32> to vector<4x256xf32>
    %16 = arith.mulf %12, %15 : vector<4x256xf32>
    %c1_i32 = arith.constant 1 : i32
    %17 = tpu.dynamic_rotate %1 by %c1_i32 dim 1 : vector<4x256xf32>, i32 -> vector<4x256xf32>
    %c3 = arith.constant 3 : index
    %c0_9 = arith.constant 0 : index
    %c0_10 = arith.constant 0 : index
    %18 = vector.load %arg1[%c3, %c0_9, %c0_10] : memref<9x1x256xf32, #tpu.memory_space<vmem>>, vector<1x1x256xf32>
    %19 = vector.shape_cast %18 : vector<1x1x256xf32> to vector<1x256xf32>
    %20 = vector.broadcast %19 : vector<1x256xf32> to vector<4x256xf32>
    %21 = arith.mulf %17, %20 : vector<4x256xf32>
    %c255_i32 = arith.constant 255 : i32
    %22 = tpu.dynamic_rotate %1 by %c255_i32 dim 1 : vector<4x256xf32>, i32 -> vector<4x256xf32>
    %c5 = arith.constant 5 : index
    %c0_11 = arith.constant 0 : index
    %c0_12 = arith.constant 0 : index
    %23 = vector.load %arg1[%c5, %c0_11, %c0_12] : memref<9x1x256xf32, #tpu.memory_space<vmem>>, vector<1x1x256xf32>
    %24 = vector.shape_cast %23 : vector<1x1x256xf32> to vector<1x256xf32>
    %25 = vector.broadcast %24 : vector<1x256xf32> to vector<4x256xf32>
    %26 = arith.mulf %22, %25 : vector<4x256xf32>
    %c241_i32 = arith.constant 241 : i32
    %27 = tpu.dynamic_rotate %1 by %c241_i32 dim 1 : vector<4x256xf32>, i32 -> vector<4x256xf32>
    %c6 = arith.constant 6 : index
    %c0_13 = arith.constant 0 : index
    %c0_14 = arith.constant 0 : index
    %28 = vector.load %arg1[%c6, %c0_13, %c0_14] : memref<9x1x256xf32, #tpu.memory_space<vmem>>, vector<1x1x256xf32>
    %29 = vector.shape_cast %28 : vector<1x1x256xf32> to vector<1x256xf32>
    %30 = vector.broadcast %29 : vector<1x256xf32> to vector<4x256xf32>
    %31 = arith.mulf %27, %30 : vector<4x256xf32>
    %c240_i32 = arith.constant 240 : i32
    %32 = tpu.dynamic_rotate %1 by %c240_i32 dim 1 : vector<4x256xf32>, i32 -> vector<4x256xf32>
    %c7 = arith.constant 7 : index
    %c0_15 = arith.constant 0 : index
    %c0_16 = arith.constant 0 : index
    %33 = vector.load %arg1[%c7, %c0_15, %c0_16] : memref<9x1x256xf32, #tpu.memory_space<vmem>>, vector<1x1x256xf32>
    %34 = vector.shape_cast %33 : vector<1x1x256xf32> to vector<1x256xf32>
    %35 = vector.broadcast %34 : vector<1x256xf32> to vector<4x256xf32>
    %36 = arith.mulf %32, %35 : vector<4x256xf32>
    %c239_i32 = arith.constant 239 : i32
    %37 = tpu.dynamic_rotate %1 by %c239_i32 dim 1 : vector<4x256xf32>, i32 -> vector<4x256xf32>
    %c8 = arith.constant 8 : index
    %c0_17 = arith.constant 0 : index
    %c0_18 = arith.constant 0 : index
    %38 = vector.load %arg1[%c8, %c0_17, %c0_18] : memref<9x1x256xf32, #tpu.memory_space<vmem>>, vector<1x1x256xf32>
    %39 = vector.shape_cast %38 : vector<1x1x256xf32> to vector<1x256xf32>
    %40 = vector.broadcast %39 : vector<1x256xf32> to vector<4x256xf32>
    %41 = arith.mulf %37, %40 : vector<4x256xf32>
    %42 = tpu.concatenate %6, %11, %16, %21, %1, %26, %31, %36, %41 in 0 : vector<4x256xf32>, vector<4x256xf32>, vector<4x256xf32>, vector<4x256xf32>, vector<4x256xf32>, vector<4x256xf32>, vector<4x256xf32>, vector<4x256xf32>, vector<4x256xf32> -> vector<36x256xf32>
    %43 = arith.truncf %42 : vector<36x256xf32> to vector<36x256xbf16>
    %c0_19 = arith.constant 0 : index
    %c0_20 = arith.constant 0 : index
    %44 = vector.load %arg3[%c0_19, %c0_20] : memref<4x36xbf16, #tpu.memory_space<vmem>>, vector<4x36xbf16>
    %cst = arith.constant dense<0.000000e+00> : vector<4x256xf32>
    %45 = tpu.matmul %44, %43, %cst {dimension_numbers = #tpu.dot_dimension_numbers<[1], [0], [0], [1], [0, 0, 1, 1], [], []>} : vector<4x36xbf16>, vector<36x256xbf16>, vector<4x256xf32> -> vector<4x256xf32>
    %c0_21 = arith.constant 0 : index
    %c0_22 = arith.constant 0 : index
    %46 = vector.load %arg4[%c0_21, %c0_22] : memref<4x1xf32, #tpu.memory_space<vmem>>, vector<4x1xf32>
    %47 = vector.broadcast %46 : vector<4x1xf32> to vector<4x256xf32>
    %48 = arith.addf %45, %47 : vector<4x256xf32>
    %49 = arith.addf %48, %1 : vector<4x256xf32>
    %c0_23 = arith.constant 0 : index
    %c0_24 = arith.constant 0 : index
    %c0_25 = arith.constant 0 : index
    %50 = vector.load %arg5[%c0_23, %c0_24, %c0_25] : memref<1x4x256xf32, #tpu.memory_space<vmem>>, vector<1x4x256xf32>
    %51 = vector.shape_cast %50 : vector<1x4x256xf32> to vector<4x256xf32>
    %52 = vector.shape_cast %49 : vector<4x256xf32> to vector<1x4x256xf32>
    tpu.vector_store %arg5[%c0_23, %c0_24, %c0_25], %52 {strides = array<i32>} : memref<1x4x256xf32, #tpu.memory_space<vmem>>, vector<1x4x256xf32>,
    return
  }
  func.func @transform_0(%arg0: i32) -> (i32, i32, i32) {
    %c0_i32 = arith.constant 0 : i32
    %c0_i32_0 = arith.constant 0 : i32
    %c0_i32_1 = arith.constant 0 : i32
    %c0_i32_2 = arith.constant 0 : i32
    return %c0_i32, %c0_i32_0, %c0_i32_1 : i32, i32, i32
  }
  func.func @transform_1(%arg0: i32) -> (i32, i32, i32) {
    %c0_i32 = arith.constant 0 : i32
    %c0_i32_0 = arith.constant 0 : i32
    %c0_i32_1 = arith.constant 0 : i32
    return %arg0, %c0_i32, %c0_i32_0 : i32, i32, i32
  }
  func.func @transform_2(%arg0: i32) -> (i32, i32) {
    %c0_i32 = arith.constant 0 : i32
    %c0_i32_0 = arith.constant 0 : i32
    %c0_i32_1 = arith.constant 0 : i32
    return %c0_i32, %c0_i32_0 : i32, i32
  }
  func.func @transform_3(%arg0: i32) -> (i32, i32) {
    %c0_i32 = arith.constant 0 : i32
    %c0_i32_0 = arith.constant 0 : i32
    %c0_i32_1 = arith.constant 0 : i32
    return %c0_i32, %c0_i32_0 : i32, i32
  }
  func.func @transform_4(%arg0: i32) -> (i32, i32, i32) {
    %c0_i32 = arith.constant 0 : i32
    %c0_i32_0 = arith.constant 0 : i32
    %c0_i32_1 = arith.constant 0 : i32
    return %arg0, %c0_i32, %c0_i32_0 : i32, i32, i32
  }
}

</mosaic_0001>

<llo_original>
// kernel: tpu_custom_call.1
$region0: #{tpu_custom_call.1}
  #allocation0 [shape = 'u32[]', space=smem, size = 0x4, offset = 0x4, fixed_abs, tag = 'smem constant byte address 0x4 - core index']
  #allocation1 [shape = 'u32[144,128]{1,0:T(1,128)}', space=vmem, size = 0x12000, scoped, tag = 'internal scratch']
  %s0 = inlined_call_operand.hbm [shape: f32[9,1,256], index: 0, kind: input, shape index: {}]
  %s1 = inlined_call_operand.hbm [shape: f32[2,4,256], index: 1, kind: input, shape index: {}]
  %s2 = inlined_call_operand.vmem [shape: bf16[4,36], index: 2, kind: input, shape index: {}]
  %s3 = inlined_call_operand.vmem [shape: f32[4,1], index: 3, kind: input, shape index: {}]
  %s4 = inlined_call_operand.hbm [shape: f32[2,4,256], index: 4, kind: output, shape index: {}]
  %s5 = sld [smem:[#allocation0]]
  $region57: #{tpu_custom_call.1} parent=0
    _
  %s7 = ssub.s32 1, %s5
  %s8 = scalar_select 0, %s7, %s5
  $region1: #{tpu_custom_call.1} parent=0
    #allocation2 [shape = 'u8[9216]{0}', space=vmem, size = 0x2400, scoped, tag = 'input window, operand 0, single buffered']
    #allocation3 [shape = 's32[2]{0}', space=sflag, size = 0x8, scoped, tag = 'scoped memory for tpu_custom_call.1']
    #allocation4 [shape = 's32[2]{0}', space=sflag, size = 0x8, scoped, tag = 'scoped memory for tpu_custom_call.1']
    #allocation5 [shape = 'u8[8192]{0}', space=vmem, size = 0x2000, scoped, tag = 'input window, operand 1']
    #allocation6 [shape = 's32[2]{0}', space=sflag, size = 0x8, scoped, tag = 'scoped memory for tpu_custom_call.1']
    #allocation7 [shape = 'u8[8192]{0}', space=vmem, size = 0x2000, scoped, tag = 'output window, operand 0']
    %9 = vsyncpa [#allocation3], 0
    %10 = vsyncpa [#allocation6], 0
    %s11 = scalar_lea.sflag [#allocation6], 1
    %12 = vsyncpa %s11, 0
    %13 = vsyncpa [#allocation4], 0
    %s14 = scalar_lea.sflag [#allocation4], 1
    %15 = vsyncpa %s14, 0
    loop: start=0, step=1, limit=4
    $region2: #{tpu_custom_call.1} parent=1 // loop_pre_header
      _
    $region3: #{tpu_custom_call.1} parent=1 // loop_header
      %s17 = sphi 0, %s21
      %p18 = scmp.ge.s32.totalorder %s17, 4
      %s25 = sphi 0, %s25
      %s27 = sphi 0, %s25
      %s28 = sphi 0, %s27
      %s42 = sphi 0, %s28
      %s48 = sphi 0, %s50
      %s51 = sphi 0, %s48
      %s52 = sphi 0, %s51
      %s68 = sphi 0, %s52
      %s72 = sphi 0, %s72
      %s74 = sphi 0, %s72
      %s75 = sphi 0, %s74
      %s89 = sphi 0, %s75
      %s93 = sphi 0, %s93
      %s95 = sphi 0, %s93
      %s96 = sphi 0, %s95
      %s110 = sphi 0, %s96
      %s116 = sphi 0, %s118
      %s119 = sphi 0, %s116
      %s120 = sphi 0, %s119
      %s136 = sphi 0, %s120
    $region4: #{tpu_custom_call.1} parent=1 // loop_header_branch
      %20 = sbr.rel (%p18) target = $region8
    $region5: #{tpu_custom_call.1} parent=1 // loop_body
      %s22 = ssub.s32 %s17, 1
      %s23 = ssub.s32 %s17, 2
      %s24 = sadd.s32 %s17, 1
      %s26 = sadd.s32 %s25, 1
      %p29 = scmp.eq.s32.totalorder %s17, 1
      %p30 = scmp.ne.s32.totalorder %s25, %s27
      %p31 = scmp.eq.s32.totalorder %s17, 0
      %p32 = por %p30, %p31
      %p33 = scmp.ne.s32.totalorder %s25, %s27
      %p34 = scmp.eq.s32.totalorder %s22, 1
      %p35 = por %p33, %p34
      %p36 = scmp.ne.s32.totalorder %s27, %s28
      %p37 = scmp.eq.s32.totalorder %s22, 0
      %p38 = por %p36, %p37
      %p39 = scmp.ne.s32.totalorder %s27, %s28
      %p40 = scmp.eq.s32.totalorder %s23, 1
      %p41 = por %p39, %p40
      %p43 = scmp.ne.s32.totalorder %s28, %s42
      %p44 = scmp.eq.s32.totalorder %s23, 0
      %p45 = por %p43, %p44
      %s46 = ssub.s32 %s17, %s24
      %p47 = scmp.eq.s32.totalorder %s46, 0
      %s49 = sadd.s32 %s48, 1
      %s50 = scalar_select %p47, %s48, %s49
      %p53 = pneg %p47
      %p54 = scmp.eq.s32.totalorder %s17, 1
      %p55 = por %p53, %p54
      %p56 = scmp.ne.s32.totalorder %s48, %s51
      %p57 = scmp.eq.s32.totalorder %s17, 0
      %p58 = por %p56, %p57
      %p59 = scmp.ne.s32.totalorder %s48, %s51
      %p60 = scmp.eq.s32.totalorder %s22, 1
      %p61 = por %p59, %p60
      %p62 = scmp.ne.s32.totalorder %s51, %s52
      %p63 = scmp.eq.s32.totalorder %s22, 0
      %p64 = por %p62, %p63
      %p65 = scmp.ne.s32.totalorder %s51, %s52
      %p66 = scmp.eq.s32.totalorder %s23, 1
      %p67 = por %p65, %p66
      %p69 = scmp.ne.s32.totalorder %s52, %s68
      %p70 = scmp.eq.s32.totalorder %s23, 0
      %p71 = por %p69, %p70
      %s73 = sadd.s32 %s72, 1
      %p76 = scmp.eq.s32.totalorder %s17, 1
      %p77 = scmp.ne.s32.totalorder %s72, %s74
      %p78 = scmp.eq.s32.totalorder %s17, 0
      %p79 = por %p77, %p78
      %p80 = scmp.ne.s32.totalorder %s72, %s74
      %p81 = scmp.eq.s32.totalorder %s22, 1
      %p82 = por %p80, %p81
      %p83 = scmp.ne.s32.totalorder %s74, %s75
      %p84 = scmp.eq.s32.totalorder %s22, 0
      %p85 = por %p83, %p84
      %p86 = scmp.ne.s32.totalorder %s74, %s75
      %p87 = scmp.eq.s32.totalorder %s23, 1
      %p88 = por %p86, %p87
      %p90 = scmp.ne.s32.totalorder %s75, %s89
      %p91 = scmp.eq.s32.totalorder %s23, 0
      %p92 = por %p90, %p91
      %s94 = sadd.s32 %s93, 1
      %p97 = scmp.eq.s32.totalorder %s17, 1
      %p98 = scmp.ne.s32.totalorder %s93, %s95
      %p99 = scmp.eq.s32.totalorder %s17, 0
      %p100 = por %p98, %p99
      %p101 = scmp.ne.s32.totalorder %s93, %s95
      %p102 = scmp.eq.s32.totalorder %s22, 1
      %p103 = por %p101, %p102
      %p104 = scmp.ne.s32.totalorder %s95, %s96
      %p105 = scmp.eq.s32.totalorder %s22, 0
      %p106 = por %p104, %p105
      %p107 = scmp.ne.s32.totalorder %s95, %s96
      %p108 = scmp.eq.s32.totalorder %s23, 1
      %p109 = por %p107, %p108
      %p111 = scmp.ne.s32.totalorder %s96, %s110
      %p112 = scmp.eq.s32.totalorder %s23, 0
      %p113 = por %p111, %p112
      %s114 = ssub.s32 %s17, %s24
      %p115 = scmp.eq.s32.totalorder %s114, 0
      %s117 = sadd.s32 %s116, 1
      %s118 = scalar_select %p115, %s116, %s117
      %p121 = pneg %p115
      %p122 = scmp.eq.s32.totalorder %s17, 1
      %p123 = por %p121, %p122
      %p124 = scmp.ne.s32.totalorder %s116, %s119
      %p125 = scmp.eq.s32.totalorder %s17, 0
      %p126 = por %p124, %p125
      %p127 = scmp.ne.s32.totalorder %s116, %s119
      %p128 = scmp.eq.s32.totalorder %s22, 1
      %p129 = por %p127, %p128
      %p130 = scmp.ne.s32.totalorder %s119, %s120
      %p131 = scmp.eq.s32.totalorder %s22, 0
      %p132 = por %p130, %p131
      %p133 = scmp.ne.s32.totalorder %s119, %s120
      %p134 = scmp.eq.s32.totalorder %s23, 1
      %p135 = por %p133, %p134
      %p137 = scmp.ne.s32.totalorder %s120, %s136
      %p138 = scmp.eq.s32.totalorder %s23, 0
      %p139 = por %p137, %p138
      %p140 = scmp.le.s32.totalorder 1, %s17
      %p141 = scmp.lt.s32.totalorder %s17, 3
      %p142 = pnand %p140, %p141
      %p143 = pneg %p142
      // Predicated region
      $region9: #{tpu_custom_call.1} parent=5 // pred_check
        _
      $region10: #{tpu_custom_call.1} parent=5 // pred_check_branch
        %145 = sbr.rel (%p142) target = $region12
      $region11: #{tpu_custom_call.1} parent=5 // pred_region
        %s146 = ssub.s32 %s17, 1
        // Predicated region
        $region13: #{tpu_custom_call.1} parent=11 // pred_check
          %p147 = pneg %p38
        $region14: #{tpu_custom_call.1} parent=11 // pred_check_branch
          %149 = sbr.rel (%p147) target = $region16
        $region15: #{tpu_custom_call.1} parent=11 // pred_region
          %s151 = ssub.s32 288, 288
          %152 = vsyncadd [#allocation3], %s151
          %s153 = sshll.u32 [#allocation2], 4
          %s154 = int_to_ptr.vmem [resolvable:$true] %s153
          %159 = dma.hbm_to_vmem [thread:$0]  %s0, 288, %s154, [#allocation3], 32, 32, 2
        $region16: #{tpu_custom_call.1} parent=11 // pred_fallthru
          _
        // Predicated region
        $region17: #{tpu_custom_call.1} parent=11 // pred_check
          %p160 = pneg %p85
        $region18: #{tpu_custom_call.1} parent=11 // pred_check_branch
          %162 = sbr.rel (%p160) target = $region20
        $region19: #{tpu_custom_call.1} parent=11 // pred_region
          _
        $region20: #{tpu_custom_call.1} parent=11 // pred_fallthru
          _
        // Predicated region
        $region21: #{tpu_custom_call.1} parent=11 // pred_check
          %p163 = pneg %p106
        $region22: #{tpu_custom_call.1} parent=11 // pred_check_branch
          %165 = sbr.rel (%p163) target = $region24
        $region23: #{tpu_custom_call.1} parent=11 // pred_region
          _
        $region24: #{tpu_custom_call.1} parent=11 // pred_fallthru
          _
      $region12: #{tpu_custom_call.1} parent=5 // pred_fallthru
        _
      %p166 = scmp.lt.s32.totalorder %s17, 2
      // Predicated region
      $region25: #{tpu_custom_call.1} parent=5 // pred_check
        %p167 = pneg %p166
      $region26: #{tpu_custom_call.1} parent=5 // pred_check_branch
        %169 = sbr.rel (%p167) target = $region28
      $region27: #{tpu_custom_call.1} parent=5 // pred_region
        // Predicated region
        $region29: #{tpu_custom_call.1} parent=27 // pred_check
          %p170 = pneg %p58
        $region30: #{tpu_custom_call.1} parent=27 // pred_check_branch
          %172 = sbr.rel (%p170) target = $region32
        $region31: #{tpu_custom_call.1} parent=27 // pred_region
          %s173 = sand.u32 %s48, 1
          %s174 = scalar_lea.sflag [#allocation6], %s173
          %s175 = sand.u32 %s48, 1
          %s176 = smul.addr %s175, 8
          %s177 = scalar_lea.vmem [#allocation5], %s176
          %s179 = ssub.s32 128, 128
          %180 = vsyncadd %s174, %s179
          %s181 = smul.addr %s17, 2
          %s182 = smul.addr %s181, 64
          %s183 = scalar_lea.hbm %s1, %s182
          %s185 = sshll.u32 %s177, 4
          %s186 = int_to_ptr.vmem [resolvable:$true] %s185
          %188 = dma.hbm_to_vmem [thread:$0]  %s183, 128, %s186, %s174
        $region32: #{tpu_custom_call.1} parent=27 // pred_fallthru
          _
      $region28: #{tpu_custom_call.1} parent=5 // pred_fallthru
        _
      %p189 = scmp.le.s32.totalorder 1, %s17
      %p190 = scmp.lt.s32.totalorder %s17, 3
      %p191 = pnand %p189, %p190
      %p192 = pneg %p191
      // Predicated region
      $region33: #{tpu_custom_call.1} parent=5 // pred_check
        _
      $region34: #{tpu_custom_call.1} parent=5 // pred_check_branch
        %194 = sbr.rel (%p191) target = $region36
      $region35: #{tpu_custom_call.1} parent=5 // pred_region
        %s195 = ssub.s32 %s17, 1
        // Predicated region
        $region37: #{tpu_custom_call.1} parent=35 // pred_check
          %p196 = pneg %p38
        $region38: #{tpu_custom_call.1} parent=35 // pred_check_branch
          %198 = sbr.rel (%p196) target = $region40
        $region39: #{tpu_custom_call.1} parent=35 // pred_region
          %199 = dma.done [#allocation3], 288
        $region40: #{tpu_custom_call.1} parent=35 // pred_fallthru
          _
        %s200 = sand.u32 %s51, 1
        %s201 = scalar_lea.sflag [#allocation6], %s200
        %s202 = sand.u32 %s51, 1
        %s203 = smul.addr %s202, 8
        %s204 = scalar_lea.vmem [#allocation5], %s203
        // Predicated region
        $region41: #{tpu_custom_call.1} parent=35 // pred_check
          %p205 = pneg %p64
        $region42: #{tpu_custom_call.1} parent=35 // pred_check_branch
          %207 = sbr.rel (%p205) target = $region44
        $region43: #{tpu_custom_call.1} parent=35 // pred_region
          %208 = dma.done %s201, 128
        $region44: #{tpu_custom_call.1} parent=35 // pred_fallthru
          _
        %p209 = pneg %p38
        %p210 = pneg %p35
        %s211 = sand.u32 %s51, 1
        %s212 = scalar_lea.sflag [#allocation6], %s211
        %s213 = sand.u32 %s51, 1
        %s214 = smul.addr %s213, 8
        %s215 = scalar_lea.vmem [#allocation5], %s214
        %p216 = pneg %p64
        %p217 = pneg %p61
        %p218 = pneg %p85
        %p219 = pneg %p82
        %p220 = pneg %p106
        %p221 = pneg %p103
        %p222 = pneg %p132
        %p223 = pneg %p129
        %s224 = sand.u32 %s119, 1
        %s225 = scalar_lea.sflag [#allocation4], %s224
        %s226 = sand.u32 %s119, 1
        %s227 = smul.addr %s226, 8
        %s228 = scalar_lea.vmem [#allocation7], %s227
        %v230 = vld [vmem:[%s204] sm:$0xff]
        %v232 = vcombine.high %v230, %v230
        %234 = vrot.lane.b32.xlu0 %v230, 17
        %v235 = vpop.permute.xlu0 %234
        %236 = vrot.lane.b32.xlu0 %v232, 17
        %v237 = vpop.permute.xlu0 %236
        %v238 = vlaneseq
        %v239 = vand.u32 %v238, 127
        %vm240 = vcmp.lt.s32.totalorder %v239, 17
        %v241 = vsel %vm240, %v235, %v237
        %v242 = vsel %vm240, %v237, %v235
        %v243 = vld [vmem:[#allocation2] sm:$0x3]
        %v245 = vlaneseq
        %v246 = vshrl.u32 %v245, 7
        %v247 = vsub.s32 0, %v246
        %v248 = vrot.slane %v243, %v247
        %v249 = vlaneseq
        %v250 = vshrl.u32 %v249, 7
        %v251 = vsub.s32 1, %v250
        %v252 = vrot.slane %v243, %v251
        %v255 = vmul.f32 %v242, %v248
        %v256 = vmul.f32 %v241, %v252
        %257 = vrot.lane.b32.xlu0 %v230, 16
        %v258 = vpop.permute.xlu0 %257
        %259 = vrot.lane.b32.xlu0 %v232, 16
        %v260 = vpop.permute.xlu0 %259
        %vm261 = vcmp.lt.s32.totalorder %v239, 16
        %v262 = vsel %vm261, %v258, %v260
        %v263 = vsel %vm261, %v260, %v258
        %s264 = scalar_lea.vmem [#allocation2], 2
        %v265 = vld [vmem:[%s264] sm:$0x3]
        %v267 = vlaneseq
        %v268 = vshrl.u32 %v267, 7
        %v269 = vsub.s32 0, %v268
        %v270 = vrot.slane %v265, %v269
        %v271 = vlaneseq
        %v272 = vshrl.u32 %v271, 7
        %v273 = vsub.s32 1, %v272
        %v274 = vrot.slane %v265, %v273
        %v277 = vmul.f32 %v263, %v270
        %v278 = vmul.f32 %v262, %v274
        %279 = vrot.lane.b32.xlu0 %v230, 15
        %v280 = vpop.permute.xlu0 %279
        %281 = vrot.lane.b32.xlu0 %v232, 15
        %v282 = vpop.permute.xlu0 %281
        %vm283 = vcmp.lt.s32.totalorder %v239, 15
        %v284 = vsel %vm283, %v280, %v282
        %v285 = vsel %vm283, %v282, %v280
        %s286 = scalar_lea.vmem [#allocation2], 4
        %v287 = vld [vmem:[%s286] sm:$0x3]
        %v289 = vlaneseq
        %v290 = vshrl.u32 %v289, 7
        %v291 = vsub.s32 0, %v290
        %v292 = vrot.slane %v287, %v291
        %v293 = vlaneseq
        %v294 = vshrl.u32 %v293, 7
        %v295 = vsub.s32 1, %v294
        %v296 = vrot.slane %v287, %v295
        %v299 = vmul.f32 %v285, %v292
        %v300 = vmul.f32 %v284, %v296
        %301 = vrot.lane.b32.xlu0 %v230, 1
        %v302 = vpop.permute.xlu0 %301
        %303 = vrot.lane.b32.xlu0 %v232, 1
        %v304 = vpop.permute.xlu0 %303
        %vm305 = vcmp.lt.s32.totalorder %v239, 1
        %v306 = vsel %vm305, %v302, %v304
        %v307 = vsel %vm305, %v304, %v302
        %s308 = scalar_lea.vmem [#allocation2], 6
        %v309 = vld [vmem:[%s308] sm:$0x3]
        %v311 = vlaneseq
        %v312 = vshrl.u32 %v311, 7
        %v313 = vsub.s32 0, %v312
        %v314 = vrot.slane %v309, %v313
        %v315 = vlaneseq
        %v316 = vshrl.u32 %v315, 7
        %v317 = vsub.s32 1, %v316
        %v318 = vrot.slane %v309, %v317
        %v321 = vmul.f32 %v307, %v314
        %v322 = vmul.f32 %v306, %v318
        %323 = vrot.lane.b32.xlu0 %v230, 127
        %v324 = vpop.permute.xlu0 %323
        %325 = vrot.lane.b32.xlu0 %v232, 127
        %v326 = vpop.permute.xlu0 %325
        %vm327 = vcmp.lt.s32.totalorder %v239, 127
        %v328 = vsel %vm327, %v324, %v326
        %v329 = vsel %vm327, %v326, %v324
        %s330 = scalar_lea.vmem [#allocation2], 10
        %v331 = vld [vmem:[%s330] sm:$0x3]
        %v333 = vlaneseq
        %v334 = vshrl.u32 %v333, 7
        %v335 = vsub.s32 0, %v334
        %v336 = vrot.slane %v331, %v335
        %v337 = vlaneseq
        %v338 = vshrl.u32 %v337, 7
        %v339 = vsub.s32 1, %v338
        %v340 = vrot.slane %v331, %v339
        %v343 = vmul.f32 %v328, %v336
        %v344 = vmul.f32 %v329, %v340
        %345 = vrot.lane.b32.xlu0 %v230, 113
        %v346 = vpop.permute.xlu0 %345
        %347 = vrot.lane.b32.xlu0 %v232, 113
        %v348 = vpop.permute.xlu0 %347
        %vm349 = vcmp.lt.s32.totalorder %v239, 113
        %v350 = vsel %vm349, %v346, %v348
        %v351 = vsel %vm349, %v348, %v346
        %s352 = scalar_lea.vmem [#allocation2], 12
        %v353 = vld [vmem:[%s352] sm:$0x3]
        %v355 = vlaneseq
        %v356 = vshrl.u32 %v355, 7
        %v357 = vsub.s32 0, %v356
        %v358 = vrot.slane %v353, %v357
        %v359 = vlaneseq
        %v360 = vshrl.u32 %v359, 7
        %v361 = vsub.s32 1, %v360
        %v362 = vrot.slane %v353, %v361
        %v365 = vmul.f32 %v350, %v358
        %v366 = vmul.f32 %v351, %v362
        %367 = vrot.lane.b32.xlu0 %v230, 112
        %v368 = vpop.permute.xlu0 %367
        %369 = vrot.lane.b32.xlu0 %v232, 112
        %v370 = vpop.permute.xlu0 %369
        %vm371 = vcmp.lt.s32.totalorder %v239, 112
        %v372 = vsel %vm371, %v368, %v370
        %v373 = vsel %vm371, %v370, %v368
        %s374 = scalar_lea.vmem [#allocation2], 14
        %v375 = vld [vmem:[%s374] sm:$0x3]
        %v377 = vlaneseq
        %v378 = vshrl.u32 %v377, 7
        %v379 = vsub.s32 0, %v378
        %v380 = vrot.slane %v375, %v379
        %v381 = vlaneseq
        %v382 = vshrl.u32 %v381, 7
        %v383 = vsub.s32 1, %v382
        %v384 = vrot.slane %v375, %v383
        %v387 = vmul.f32 %v372, %v380
        %v388 = vmul.f32 %v373, %v384
        %389 = vrot.lane.b32.xlu0 %v230, 111
        %v390 = vpop.permute.xlu0 %389
        %391 = vrot.lane.b32.xlu0 %v232, 111
        %v392 = vpop.permute.xlu0 %391
        %vm393 = vcmp.lt.s32.totalorder %v239, 111
        %v394 = vsel %vm393, %v390, %v392
        %v395 = vsel %vm393, %v392, %v390
        %s396 = scalar_lea.vmem [#allocation2], 16
        %v397 = vld [vmem:[%s396] sm:$0x3]
        %v399 = vlaneseq
        %v400 = vshrl.u32 %v399, 7
        %v401 = vsub.s32 0, %v400
        %v402 = vrot.slane %v397, %v401
        %v403 = vlaneseq
        %v404 = vshrl.u32 %v403, 7
        %v405 = vsub.s32 1, %v404
        %v406 = vrot.slane %v397, %v405
        %v409 = vmul.f32 %v394, %v402
        %v410 = vmul.f32 %v395, %v406
        %v413 = vrot.slane %v277, 4
        %v414 = vrot.slane %v278, 4
        %v419 = vrot.slane %v321, 4
        %v420 = vrot.slane %v322, 4
        %v425 = vrot.slane %v343, 4
        %v426 = vrot.slane %v344, 4
        %v431 = vrot.slane %v387, 4
        %v432 = vrot.slane %v388, 4
        %vm435 = vcmask 1043456
        %v436 = vsel %vm435, %v255, %v413
        %v437 = vsel %vm435, %v256, %v414
        %v438 = vsel %vm435, %v299, %v419
        %v439 = vsel %vm435, %v300, %v420
        %v440 = vsel %vm435, %v230, %v425
        %v441 = vsel %vm435, %v232, %v426
        %v442 = vsel %vm435, %v365, %v431
        %v443 = vsel %vm435, %v366, %v432
        %v444 = vpack.c.bf16 %v438, %v436
        %v445 = vpack.c.bf16 %v439, %v437
        %v446 = vpack.c.bf16 %v442, %v440
        %v447 = vpack.c.bf16 %v443, %v441
        %v448 = vpack.c.bf16 %v409, %v409
        %v449 = vpack.c.bf16 %v410, %v410
        %v450 = vld [vmem:[%s2] sm:$0x3]
        %v451 = vld [vmem:[%s3] sm:$0xf]
        %453 = vset.pattern.permute.xlu0 0
        %454 = vperm.xlu0 %453, %v451
        %v455 = vpop.permute.xlu0 %454
        %vm457 = vcmask 293888
        %v459 = vsel %vm457, %v450, 0
        %vm461 = vcmask 1041408
        %v463 = vsel %vm461, %v448, 0
        %v466 = vsel %vm461, %v449, 0
        %468 = vmatprep.subr.bf16.mxu0 %v445
        %469 = vmatpush1.bf16.msra.mxu0 %v444
        %470 = vmatprep.subr.bf16.mxu0 %v447
        %471 = vmatpush1.bf16.msra.mxu0 %v446
        %472 = vmatprep.subr.bf16.mxu0 %v466
        %473 = vmatpush1.bf16.msra.mxu0 %v463
        %474 = vmatprep.subr.bf16.mxu0 0
        %475 = vmatpush1.bf16.msra.mxu0 0
        %476 = vmatprep.subr.bf16.mxu0 0
        %477 = vmatpush1.bf16.msra.mxu0 0
        %478 = vmatprep.subr.bf16.mxu0 0
        %479 = vmatpush1.bf16.msra.mxu0 0
        %480 = vmatprep.subr.bf16.mxu0 0
        %481 = vmatpush1.bf16.msra.mxu0 0
        %482 = vmatprep.subr.bf16.mxu0 0
        %483 = vmatpush1.bf16.msra.mxu0 0
        %484 = vmatprep.subr.bf16.mxu0 0
        %485 = vmatpush1.bf16.msra.mxu0 0
        %486 = vmatprep.subr.bf16.mxu0 0
        %487 = vmatpush1.bf16.msra.mxu0 0
        %488 = vmatprep.subr.bf16.mxu0 0
        %489 = vmatpush1.bf16.msra.mxu0 0
        %490 = vmatprep.subr.bf16.mxu0 0
        %491 = vmatpush1.bf16.msra.mxu0 0
        %492 = vmatprep.subr.bf16.mxu0 0
        %493 = vmatpush1.bf16.msra.mxu0 0
        %494 = vmatprep.subr.bf16.mxu0 0
        %495 = vmatpush1.bf16.msra.mxu0 0
        %496 = vmatprep.subr.bf16.mxu0 0
        %497 = vmatpush1.bf16.msra.mxu0 0
        %498 = vmatprep.subr.bf16.mxu0 0
        %499 = vmatpush1.bf16.msra.mxu0 0
        %500 = vmatprep.mubr.bf16.mxu0 0
        %501 = vmatmul.mubr.bf16.gmra.mrb[0].mxu0 %v459
        %v502 = vpop.f32.mrb[0].mxu0
        %v503 = vadd.f32 %v455, %v502
        %v504 = vpop.f32.mrb[0].mxu0
        %v505 = vadd.f32 %v455, %v504
        %v506 = vpop.f32.mrb[0].mxu0
        %v507 = vpop.f32.mrb[0].mxu0
        %508 = vdwg.mxu0
        %v509 = vadd.f32 %v503, %v230
        %v510 = vadd.f32 %v505, %v232
        %v513 = vcombine.low %v509, %v510
        %515 = vst [vmem:[%s228] sm:$0xff] %v513
        %s516 = sand.u32 %s119, 1
        %s517 = scalar_lea.sflag [#allocation4], %s516
        %s518 = sand.u32 %s119, 1
        %s519 = smul.addr %s518, 8
        %s520 = scalar_lea.vmem [#allocation7], %s519
        // Predicated region
        $region45: #{tpu_custom_call.1} parent=35 // pred_check
          %p521 = pneg %p129
        $region46: #{tpu_custom_call.1} parent=35 // pred_check_branch
          %523 = sbr.rel (%p521) target = $region48
        $region47: #{tpu_custom_call.1} parent=35 // pred_region
          %s525 = ssub.s32 128, 128
          %526 = vsyncadd %s517, %s525
          %s527 = smul.addr %s22, 2
          %s528 = smul.addr %s527, 64
          %s529 = scalar_lea.hbm %s4, %s528
          %s531 = sshll.u32 %s520, 4
          %s532 = int_to_ptr.vmem [resolvable:$true] %s531
          %534 = dma.vmem_to_hbm [thread:$0]  %s532, 128, %s529, %s517
        $region48: #{tpu_custom_call.1} parent=35 // pred_fallthru
          _
      $region36: #{tpu_custom_call.1} parent=5 // pred_fallthru
        _
      %p535 = scmp.le.s32.totalorder 2, %s17
      // Predicated region
      $region49: #{tpu_custom_call.1} parent=5 // pred_check
        %p536 = pneg %p535
      $region50: #{tpu_custom_call.1} parent=5 // pred_check_branch
        %538 = sbr.rel (%p536) target = $region52
      $region51: #{tpu_custom_call.1} parent=5 // pred_region
        %s539 = ssub.s32 %s17, 2
        // Predicated region
        $region53: #{tpu_custom_call.1} parent=51 // pred_check
          %p540 = pneg %p135
        $region54: #{tpu_custom_call.1} parent=51 // pred_check_branch
          %542 = sbr.rel (%p540) target = $region56
        $region55: #{tpu_custom_call.1} parent=51 // pred_region
          %s543 = sand.u32 %s120, 1
          %s544 = scalar_lea.sflag [#allocation4], %s543
          %s545 = sand.u32 %s120, 1
          %s546 = smul.addr %s545, 8
          %s547 = scalar_lea.vmem [#allocation7], %s546
          %548 = dma.done %s544, 128
        $region56: #{tpu_custom_call.1} parent=51 // pred_fallthru
          _
      $region52: #{tpu_custom_call.1} parent=5 // pred_fallthru
        _
    $region6: #{tpu_custom_call.1} parent=1 // loop_footer
      %s21 = sadd.s32 1, %s17
    $region7: #{tpu_custom_call.1} parent=1 // loop_footer_branch
      %16 = sbr.rel target = $region3
    $region8: #{tpu_custom_call.1} parent=1 // loop_exit
      _
    %549 = vsyncpa [#allocation3], 1
    %s550 = scalar_lea.sflag [#allocation3], 1
    %551 = vsyncpa %s550, 1
    %552 = vsyncpa [#allocation6], 1
    %s553 = scalar_lea.sflag [#allocation6], 1
    %554 = vsyncpa %s553, 1
    %555 = vsyncpa [#allocation4], 1
    %s556 = scalar_lea.sflag [#allocation4], 1
    %557 = vsyncpa %s556, 1

</llo_original>
